<compile_context>
chip_gen: v6e
topology: v6e:2x2x1
jax: 0.10.0
libtpu: 0.0.40
codegen_flags: <defaults>
</compile_context>

<pallas_src>
import jax
import jax.numpy as jnp
from jax.experimental import pallas as pl
from jax.experimental.pallas import tpu as pltpu

LANE = 128


def _round_up(x, m):
    return -(-x // m) * m


def _make_kernel(TR, T, G, need_guard):
    """Build the kernel closure for a given row-tile size / grid split."""

    def kernel(pred_ref, true_ref, ssm_ref, ss_ref, cm_ref, mx_ref):
        i = pl.program_id(0)   # parallel chunk (sharded across TCs on v7x)
        j = pl.program_id(1)   # row-tile within chunk (reduction axis)

        @pl.when(j == 0)
        def _init():
            ssm_ref[...] = jnp.zeros_like(ssm_ref)
            ss_ref[...] = jnp.zeros_like(ss_ref)
            cm_ref[...] = jnp.zeros_like(cm_ref)
            mx_ref[...] = jnp.zeros_like(mx_ref)

        def _acc():
            p = pred_ref[...].astype(jnp.float32)
            t = true_ref[...].astype(jnp.float32)
            d = p - t
            sq = d * d
            absd = jnp.abs(d)
            is_big = jnp.abs(t) > 1.0

            # Fold (TR,128) -> (TR/8, 8, 128); leading-axis reductions are
            # pure vreg-wise VPU adds/max (no per-step XLU work).  The reshape
            # does not cross (8,128) tile boundaries, so it is layout-free.
            sq3 = sq.reshape(TR // 8, 8, LANE)
            msq3 = jnp.where(is_big, sq, 0.0).reshape(TR // 8, 8, LANE)
            cnt3 = is_big.astype(jnp.float32).reshape(TR // 8, 8, LANE)
            abs3 = absd.reshape(TR // 8, 8, LANE)

            ss_ref[...] += jnp.sum(sq3, axis=0)
            ssm_ref[...] += jnp.sum(msq3, axis=0)
            cm_ref[...] += jnp.sum(cnt3, axis=0)
            mx_ref[...] = jnp.maximum(mx_ref[...], jnp.max(abs3, axis=0))

        if need_guard:
            # Skip duplicated (index-clamped) tail tiles.
            pl.when(i * T + j < G)(_acc)
        else:
            _acc()

    return kernel


def mixed_loss(pred, true, *, max_rows_per_tile=2048):
    pred = jnp.asarray(pred)
    true = jnp.asarray(true)
    assert pred.shape == true.shape
    n = int(pred.size)

    pred = pred.reshape(-1)
    true = true.reshape(-1)

    # Sublane granularity depends on element width (sub-32-bit packing).
    itemsize = jnp.dtype(pred.dtype).itemsize
    sub = {4: 8, 2: 16, 1: 32}.get(itemsize, 8)

    rows = -(-n // LANE)
    TR = min(_round_up(max_rows_per_tile, sub), _round_up(rows, sub))
    G = -(-rows // TR)            # number of real row tiles
    rows_pad = G * TR
    total = rows_pad * LANE

    def prep(x):
        if total == n:
            return x.reshape(rows_pad, LANE)   # no-copy fast path (common case)
        # TODO(synk): for very large ragged inputs, pad only the tail tile
        # instead of re-materializing the whole flattened array in HBM.
        return jnp.pad(x, (0, total - n)).reshape(rows_pad, LANE)

    pred_p = prep(pred)
    true_p = prep(true)

    # Split the row-tile range into P parallel chunks (uses both TCs on v7x;
    # costs nothing on single-TC v5e/v6e).
    P = 2 if G >= 2 else 1
    T = -(-G // P)
    need_guard = (P * T != G)

    in_map = lambda i, j: (jnp.minimum(i * T + j, G - 1), 0)
    out_map = lambda i, j: (i, 0)

    acc_shape = jax.ShapeDtypeStruct((P * 8, LANE), jnp.float32)
    acc_spec = pl.BlockSpec((8, LANE), out_map)

    bytes_accessed = 2 * total * itemsize + 4 * P * 8 * LANE * 4
    cost = pl.CostEstimate(flops=10 * total, transcendentals=0,
                           bytes_accessed=bytes_accessed)

    ssm, ss, cm, mx = pl.pallas_call(
        _make_kernel(TR, T, G, need_guard),
        out_shape=(acc_shape,) * 4,
        grid=(P, T),
        in_specs=[
            pl.BlockSpec((TR, LANE), in_map),
            pl.BlockSpec((TR, LANE), in_map),
        ],
        out_specs=(acc_spec,) * 4,
        compiler_params=pltpu.CompilerParams(
            dimension_semantics=("parallel", "arbitrary")),
        cost_estimate=cost,
    )(pred_p, true_p)

    # Final scalar reduction + data-dependent branch select (tiny, done in XLA).
    ssm = jnp.sum(ssm)
    ss = jnp.sum(ss)
    cm = jnp.sum(cm)
    mx = jnp.max(mx)

    n_f = jnp.float32(n)
    ssn = jnp.maximum(ss - ssm, 0.0)
    cn = n_f - cm
    loss_masked = 0.7 * jnp.sqrt(ssm / cm) + 0.3 * jnp.sqrt(ssn / cn)
    loss_all = 0.7 * jnp.sqrt(ss / n_f) + 0.3 * mx
    return jnp.where(cm > 200.0, loss_masked, loss_all)


def mixed_loss_ref(pred, true):
    # pure-JAX reference of the PyTorch forward
    pred = jnp.asarray(pred, jnp.float32).reshape(-1)
    true = jnp.asarray(true, jnp.float32).reshape(-1)
    mask = jnp.abs(true) > 1.0
    cm = jnp.sum(mask)
    d = pred - true
    sq = d * d
    ssm = jnp.sum(jnp.where(mask, sq, 0.0))
    ssn = jnp.sum(jnp.where(~mask, sq, 0.0))
    cn = jnp.sum(~mask)
    loss_masked = 0.7 * jnp.sqrt(ssm / cm) + 0.3 * jnp.sqrt(ssn / cn)
    loss_all = 0.7 * jnp.sqrt(jnp.mean(sq)) + 0.3 * jnp.max(jnp.abs(d))
    return jnp.where(cm > 200, loss_masked, loss_all)


if __name__ == "__main__":
    key = jax.random.PRNGKey(0)
    ks = jax.random.split(key, 8)

    # case 1: many |true| > 1 -> masked two-RMSE branch (no padding, G=1)
    pred1 = jax.random.normal(ks[0], (2, 4, 16, 16), jnp.float32)
    true1 = 2.0 * jax.random.normal(ks[1], (2, 4, 16, 16), jnp.float32)

    # case 2: count(|true|>1) == 0 <= 200 -> global RMSE + max branch
    pred2 = 0.1 * jax.random.normal(ks[2], (2, 4, 16, 16), jnp.float32)
    true2 = 0.1 * jax.random.uniform(ks[3], (2, 4, 16, 16), jnp.float32)

    # case 3: ragged size -> exercises the padded-tail path
    pred3 = jax.random.normal(ks[4], (3, 5, 7, 11), jnp.float32)
    true3 = 2.0 * jax.random.normal(ks[5], (3, 5, 7, 11), jnp.float32)

    # case 4: multi-tile grid with parallel split + clamped/guarded tail tile
    pred4 = jax.random.normal(ks[6], (2, 5, 16, 32), jnp.float32)
    true4 = 2.0 * jax.random.normal(ks[7], (2, 5, 16, 32), jnp.float32)

    cases = [
        (pred1, true1, {}),
        (pred2, true2, {}),
        (pred3, true3, {}),
        (pred4, true4, {"max_rows_per_tile": 16}),
    ]

    for pred, true, kw in cases:
        out = jax.block_until_ready(mixed_loss(pred, true, **kw))
        ref = jax.block_until_ready(mixed_loss_ref(pred, true))
        assert jnp.allclose(out, ref, rtol=1e-5, atol=1e-5), (out, ref)

    print("KERNEL_OK")
</pallas_src>

<mosaic_0001>
module attributes {stable_mosaic.version = 11 : i64} {
  func.func @kernel(%arg0: i32, %arg1: i32, %arg2: memref<16x128xf32, #tpu.memory_space<vmem>>, %arg3: memref<16x128xf32, #tpu.memory_space<vmem>>, %arg4: memref<8x128xf32, #tpu.memory_space<vmem>>, %arg5: memref<8x128xf32, #tpu.memory_space<vmem>>, %arg6: memref<8x128xf32, #tpu.memory_space<vmem>>, %arg7: memref<8x128xf32, #tpu.memory_space<vmem>>) attributes {dimension_semantics = [#tpu.dimension_semantics<parallel>, #tpu.dimension_semantics<arbitrary>], iteration_bounds = array<i64: 1, 1>, scalar_prefetch = 0 : i64, scratch_operands = 0 : i64, tpu.core_type = #tpu.core_type<tc>, window_params = [{transform_indices = @transform_0, window_bounds = array<i64: 16, 128>}, {transform_indices = @transform_1, window_bounds = array<i64: 16, 128>}, {transform_indices = @transform_2, window_bounds = array<i64: 8, 128>}, {transform_indices = @transform_3, window_bounds = array<i64: 8, 128>}, {transform_indices = @transform_4, window_bounds = array<i64: 8, 128>}, {transform_indices = @transform_5, window_bounds = array<i64: 8, 128>}]} {
    %c0_i32 = arith.constant 0 : i32
    %0 = arith.cmpi eq, %arg1, %c0_i32 : i32
    %1 = arith.extui %0 : i1 to i32
    %c0_i32_0 = arith.constant 0 : i32
    %2 = arith.cmpi ne, %1, %c0_i32_0 : i32
    scf.if %2 {
      %cst_25 = arith.constant 0.000000e+00 : f32
      %35 = vector.broadcast %cst_25 : f32 to vector<8x128xf32>
      %c0_26 = arith.constant 0 : index
      %c0_27 = arith.constant 0 : index
      %36 = vector.load %arg4[%c0_26, %c0_27] : memref<8x128xf32, #tpu.memory_space<vmem>>, vector<8x128xf32>
      tpu.vector_store %arg4[%c0_26, %c0_27], %35 {strides = array<i32>} : memref<8x128xf32, #tpu.memory_space<vmem>>, vector<8x128xf32>,
      %cst_28 = arith.constant 0.000000e+00 : f32
      %37 = vector.broadcast %cst_28 : f32 to vector<8x128xf32>
      %c0_29 = arith.constant 0 : index
      %c0_30 = arith.constant 0 : index
      %38 = vector.load %arg5[%c0_29, %c0_30] : memref<8x128xf32, #tpu.memory_space<vmem>>, vector<8x128xf32>
      tpu.vector_store %arg5[%c0_29, %c0_30], %37 {strides = array<i32>} : memref<8x128xf32, #tpu.memory_space<vmem>>, vector<8x128xf32>,
      %cst_31 = arith.constant 0.000000e+00 : f32
      %39 = vector.broadcast %cst_31 : f32 to vector<8x128xf32>
      %c0_32 = arith.constant 0 : index
      %c0_33 = arith.constant 0 : index
      %40 = vector.load %arg6[%c0_32, %c0_33] : memref<8x128xf32, #tpu.memory_space<vmem>>, vector<8x128xf32>
      tpu.vector_store %arg6[%c0_32, %c0_33], %39 {strides = array<i32>} : memref<8x128xf32, #tpu.memory_space<vmem>>, vector<8x128xf32>,
      %cst_34 = arith.constant 0.000000e+00 : f32
      %41 = vector.broadcast %cst_34 : f32 to vector<8x128xf32>
      %c0_35 = arith.constant 0 : index
      %c0_36 = arith.constant 0 : index
      %42 = vector.load %arg7[%c0_35, %c0_36] : memref<8x128xf32, #tpu.memory_space<vmem>>, vector<8x128xf32>
      tpu.vector_store %arg7[%c0_35, %c0_36], %41 {strides = array<i32>} : memref<8x128xf32, #tpu.memory_space<vmem>>, vector<8x128xf32>,
    } else {
    }
    %c0 = arith.constant 0 : index
    %c0_1 = arith.constant 0 : index
    %3 = vector.load %arg2[%c0, %c0_1] : memref<16x128xf32, #tpu.memory_space<vmem>>, vector<16x128xf32>
    %c0_2 = arith.constant 0 : index
    %c0_3 = arith.constant 0 : index
    %4 = vector.load %arg3[%c0_2, %c0_3] : memref<16x128xf32, #tpu.memory_space<vmem>>, vector<16x128xf32>
    %5 = arith.subf %3, %4 : vector<16x128xf32>
    %6 = arith.mulf %5, %5 : vector<16x128xf32>
    %7 = math.absf %5 : vector<16x128xf32>
    %8 = math.absf %4 : vector<16x128xf32>
    %cst = arith.constant 1.000000e+00 : f32
    %9 = vector.broadcast %cst : f32 to vector<16x128xf32>
    %10 = arith.cmpf ogt, %8, %9 : vector<16x128xf32>
    %11 = vector.shape_cast %6 : vector<16x128xf32> to vector<2x8x128xf32>
    %cst_4 = arith.constant 0.000000e+00 : f32
    %12 = vector.broadcast %cst_4 : f32 to vector<16x128xf32>
    %13 = arith.select %10, %6, %12 : vector<16x128xi1>, vector<16x128xf32>
    %14 = vector.shape_cast %13 : vector<16x128xf32> to vector<2x8x128xf32>
    %15 = arith.extui %10 : vector<16x128xi1> to vector<16x128xi32>
    %16 = arith.sitofp %15 : vector<16x128xi32> to vector<16x128xf32>
    %17 = vector.shape_cast %16 : vector<16x128xf32> to vector<2x8x128xf32>
    %18 = vector.shape_cast %7 : vector<16x128xf32> to vector<2x8x128xf32>
    %c0_5 = arith.constant 0 : index
    %c0_6 = arith.constant 0 : index
    %19 = vector.load %arg5[%c0_5, %c0_6] : memref<8x128xf32, #tpu.memory_space<vmem>>, vector<8x128xf32>
    %cst_7 = arith.constant dense<0.000000e+00> : vector<8x128xf32>
    %20 = vector.multi_reduction <add>, %11, %cst_7 [0] : vector<2x8x128xf32> to vector<8x128xf32>
    %21 = arith.addf %19, %20 : vector<8x128xf32>
    %c0_8 = arith.constant 0 : index
    %c0_9 = arith.constant 0 : index
    %22 = vector.load %arg5[%c0_8, %c0_9] : memref<8x128xf32, #tpu.memory_space<vmem>>, vector<8x128xf32>
    tpu.vector_store %arg5[%c0_8, %c0_9], %21 {strides = array<i32>} : memref<8x128xf32, #tpu.memory_space<vmem>>, vector<8x128xf32>,
    %c0_10 = arith.constant 0 : index
    %c0_11 = arith.constant 0 : index
    %23 = vector.load %arg4[%c0_10, %c0_11] : memref<8x128xf32, #tpu.memory_space<vmem>>, vector<8x128xf32>
    %cst_12 = arith.constant dense<0.000000e+00> : vector<8x128xf32>
    %24 = vector.multi_reduction <add>, %14, %cst_12 [0] : vector<2x8x128xf32> to vector<8x128xf32>
    %25 = arith.addf %23, %24 : vector<8x128xf32>
    %c0_13 = arith.constant 0 : index
    %c0_14 = arith.constant 0 : index
    %26 = vector.load %arg4[%c0_13, %c0_14] : memref<8x128xf32, #tpu.memory_space<vmem>>, vector<8x128xf32>
    tpu.vector_store %arg4[%c0_13, %c0_14], %25 {strides = array<i32>} : memref<8x128xf32, #tpu.memory_space<vmem>>, vector<8x128xf32>,
    %c0_15 = arith.constant 0 : index
    %c0_16 = arith.constant 0 : index
    %27 = vector.load %arg6[%c0_15, %c0_16] : memref<8x128xf32, #tpu.memory_space<vmem>>, vector<8x128xf32>
    %cst_17 = arith.constant dense<0.000000e+00> : vector<8x128xf32>
    %28 = vector.multi_reduction <add>, %17, %cst_17 [0] : vector<2x8x128xf32> to vector<8x128xf32>
    %29 = arith.addf %27, %28 : vector<8x128xf32>
    %c0_18 = arith.constant 0 : index
    %c0_19 = arith.constant 0 : index
    %30 = vector.load %arg6[%c0_18, %c0_19] : memref<8x128xf32, #tpu.memory_space<vmem>>, vector<8x128xf32>
    tpu.vector_store %arg6[%c0_18, %c0_19], %29 {strides = array<i32>} : memref<8x128xf32, #tpu.memory_space<vmem>>, vector<8x128xf32>,
    %c0_20 = arith.constant 0 : index
    %c0_21 = arith.constant 0 : index
    %31 = vector.load %arg7[%c0_20, %c0_21] : memref<8x128xf32, #tpu.memory_space<vmem>>, vector<8x128xf32>
    %cst_22 = arith.constant dense<0xFF800000> : vector<8x128xf32>
    %32 = vector.multi_reduction <maximumf>, %18, %cst_22 [0] : vector<2x8x128xf32> to vector<8x128xf32>
    %33 = arith.maximumf %31, %32 : vector<8x128xf32>
    %c0_23 = arith.constant 0 : index
    %c0_24 = arith.constant 0 : index
    %34 = vector.load %arg7[%c0_23, %c0_24] : memref<8x128xf32, #tpu.memory_space<vmem>>, vector<8x128xf32>
    tpu.vector_store %arg7[%c0_23, %c0_24], %33 {strides = array<i32>} : memref<8x128xf32, #tpu.memory_space<vmem>>, vector<8x128xf32>,
    return
  }
  func.func @transform_0(%arg0: i32, %arg1: i32) -> (i32, i32) {
    %c1_i32 = arith.constant 1 : i32
    %0 = arith.muli %arg0, %c1_i32 : i32
    %1 = arith.addi %0, %arg1 : i32
    %c0_i32 = arith.constant 0 : i32
    %2 = arith.minsi %1, %c0_i32 : i32
    %c0_i32_0 = arith.constant 0 : i32
    %c0_i32_1 = arith.constant 0 : i32
    return %2, %c0_i32_0 : i32, i32
  }
  func.func @transform_1(%arg0: i32, %arg1: i32) -> (i32, i32) {
    %c1_i32 = arith.constant 1 : i32
    %0 = arith.muli %arg0, %c1_i32 : i32
    %1 = arith.addi %0, %arg1 : i32
    %c0_i32 = arith.constant 0 : i32
    %2 = arith.minsi %1, %c0_i32 : i32
    %c0_i32_0 = arith.constant 0 : i32
    %c0_i32_1 = arith.constant 0 : i32
    return %2, %c0_i32_0 : i32, i32
  }
  func.func @transform_2(%arg0: i32, %arg1: i32) -> (i32, i32) {
    %c0_i32 = arith.constant 0 : i32
    %c0_i32_0 = arith.constant 0 : i32
    return %arg0, %c0_i32 : i32, i32
  }
  func.func @transform_3(%arg0: i32, %arg1: i32) -> (i32, i32) {
    %c0_i32 = arith.constant 0 : i32
    %c0_i32_0 = arith.constant 0 : i32
    return %arg0, %c0_i32 : i32, i32
  }
  func.func @transform_4(%arg0: i32, %arg1: i32) -> (i32, i32) {
    %c0_i32 = arith.constant 0 : i32
    %c0_i32_0 = arith.constant 0 : i32
    return %arg0, %c0_i32 : i32, i32
  }
  func.func @transform_5(%arg0: i32, %arg1: i32) -> (i32, i32) {
    %c0_i32 = arith.constant 0 : i32
    %c0_i32_0 = arith.constant 0 : i32
    return %arg0, %c0_i32 : i32, i32
  }
}

</mosaic_0001>

<llo_original>
// kernel: tpu_custom_call.1
$region0: #{tpu_custom_call.1}
  #allocation0 [shape = 'u32[]', space=smem, size = 0x4, offset = 0x4, fixed_abs, tag = 'smem constant byte address 0x4 - core index']
  #allocation1 [shape = 'u32[144,128]{1,0:T(1,128)}', space=vmem, size = 0x12000, scoped, tag = 'internal scratch']
  %s0 = inlined_call_operand.hbm [shape: f32[16,128], index: 0, kind: input, shape index: {}]
  %s1 = inlined_call_operand.hbm [shape: f32[16,128], index: 1, kind: input, shape index: {}]
  %s2 = inlined_call_operand.hbm [shape: f32[8,128], index: 2, kind: output, shape index: {0}]
  %s3 = inlined_call_operand.hbm [shape: f32[8,128], index: 3, kind: output, shape index: {1}]
  %s4 = inlined_call_operand.hbm [shape: f32[8,128], index: 4, kind: output, shape index: {2}]
  %s5 = inlined_call_operand.hbm [shape: f32[8,128], index: 5, kind: output, shape index: {3}]
  %6 = xla_tuple %s2, %s3, %s4, %s5
  %s7 = sld [smem:[#allocation0]]
  $region54: #{tpu_custom_call.1} parent=0
    _
  %s9 = ssub.s32 1, %s7
  %s10 = scalar_select 0, %s9, %s7
  $region1: #{tpu_custom_call.1} parent=0
    #allocation2 [shape = 'u8[8192]{0}', space=vmem, size = 0x2000, scoped, tag = 'input window, operand 0, single buffered']
    #allocation3 [shape = 's32[1]{0}', space=sflag, size = 0x4, scoped, tag = 'scoped memory for tpu_custom_call.1']
    #allocation4 [shape = 's32[1]{0}', space=sflag, size = 0x4, scoped, tag = 'scoped memory for tpu_custom_call.1']
    #allocation5 [shape = 'u8[8192]{0}', space=vmem, size = 0x2000, scoped, tag = 'input window, operand 1, single buffered']
    #allocation6 [shape = 's32[1]{0}', space=sflag, size = 0x4, scoped, tag = 'scoped memory for tpu_custom_call.1']
    #allocation7 [shape = 'u8[4096]{0}', space=vmem, size = 0x1000, scoped, tag = 'output window, operand 0, single buffered']
    #allocation8 [shape = 'u8[4096]{0}', space=vmem, size = 0x1000, scoped, tag = 'output window, operand 1, single buffered']
    #allocation9 [shape = 's32[1]{0}', space=sflag, size = 0x4, scoped, tag = 'scoped memory for tpu_custom_call.1']
    #allocation10 [shape = 'u8[4096]{0}', space=vmem, size = 0x1000, scoped, tag = 'output window, operand 2, single buffered']
    #allocation11 [shape = 'u8[4096]{0}', space=vmem, size = 0x1000, scoped, tag = 'output window, operand 3, single buffered']
    #allocation12 [shape = 's32[1]{0}', space=sflag, size = 0x4, scoped, tag = 'scoped memory for tpu_custom_call.1']
    %11 = vsyncpa [#allocation3], 0
    %12 = vsyncpa [#allocation6], 0
    %13 = vsyncpa [#allocation4], 0
    %14 = vsyncpa [#allocation9], 0
    %15 = vsyncpa [#allocation12], 0
    // Predicated region
    $region2: #{tpu_custom_call.1} parent=1 // pred_check
      _
    $region3: #{tpu_custom_call.1} parent=1 // pred_check_branch
      %17 = sbr.rel (0) target = $region5
    $region4: #{tpu_custom_call.1} parent=1 // pred_region
      %s18 = sadd.s32 0, 0
      %p19 = scmp.lt.s32.totalorder %s18, 0
      %s20 = scalar_select %p19, %s18, 0
      %s21 = smul.u32 2, %s20
      %s23 = ssub.s32 256, 256
      %24 = vsyncadd [#allocation3], %s23
      %s25 = smul.addr %s21, 128
      %s26 = scalar_lea.hbm %s0, %s25
      %s27 = sshll.u32 [#allocation2], 4
      %s28 = int_to_ptr.vmem [resolvable:$true] %s27
      %33 = dma.hbm_to_vmem [thread:$0]  %s26, 256, %s28, [#allocation3], 128, 128, 8
    $region5: #{tpu_custom_call.1} parent=1 // pred_fallthru
      _
    // Predicated region
    $region6: #{tpu_custom_call.1} parent=1 // pred_check
      _
    $region7: #{tpu_custom_call.1} parent=1 // pred_check_branch
      %35 = sbr.rel (0) target = $region9
    $region8: #{tpu_custom_call.1} parent=1 // pred_region
      %s36 = sadd.s32 0, 0
      %p37 = scmp.lt.s32.totalorder %s36, 0
      %s38 = scalar_select %p37, %s36, 0
      %s39 = smul.u32 2, %s38
      %s41 = ssub.s32 256, 256
      %42 = vsyncadd [#allocation6], %s41
      %s43 = smul.addr %s39, 128
      %s44 = scalar_lea.hbm %s1, %s43
      %s45 = sshll.u32 [#allocation5], 4
      %s46 = int_to_ptr.vmem [resolvable:$true] %s45
      %51 = dma.hbm_to_vmem [thread:$0]  %s44, 256, %s46, [#allocation6], 128, 128, 8
    $region9: #{tpu_custom_call.1} parent=1 // pred_fallthru
      _
    // Predicated region
    $region10: #{tpu_custom_call.1} parent=1 // pred_check
      _
    $region11: #{tpu_custom_call.1} parent=1 // pred_check_branch
      %53 = sbr.rel (0) target = $region13
    $region12: #{tpu_custom_call.1} parent=1 // pred_region
      %54 = dma.done [#allocation3], 256
    $region13: #{tpu_custom_call.1} parent=1 // pred_fallthru
      _
    // Predicated region
    $region14: #{tpu_custom_call.1} parent=1 // pred_check
      _
    $region15: #{tpu_custom_call.1} parent=1 // pred_check_branch
      %56 = sbr.rel (0) target = $region17
    $region16: #{tpu_custom_call.1} parent=1 // pred_region
      %57 = dma.done [#allocation6], 256
    $region17: #{tpu_custom_call.1} parent=1 // pred_fallthru
      _
    %s58 = sadd.s32 0, 0
    %p59 = scmp.lt.s32.totalorder %s58, 0
    %s60 = scalar_select %p59, %s58, 0
    %s61 = smul.u32 2, %s60
    %s62 = sadd.s32 0, 0
    %p63 = scmp.lt.s32.totalorder %s62, 0
    %s64 = scalar_select %p63, %s62, 0
    %s65 = smul.u32 2, %s64
    %p66 = scmp.eq.s32.totalorder 0, 0
    // Predicated region
    $region18: #{tpu_custom_call.1} parent=1 // pred_check
      %p67 = pneg %p66
    $region19: #{tpu_custom_call.1} parent=1 // pred_check_branch
      %69 = sbr.rel (%p67) target = $region21
    $region20: #{tpu_custom_call.1} parent=1 // pred_region
      %70 = vst [vmem:[#allocation7] sm:$0xff] 0.0
      %71 = vst [vmem:[#allocation8] sm:$0xff] 0.0
      %72 = vst [vmem:[#allocation10] sm:$0xff] 0.0
      %73 = vst [vmem:[#allocation11] sm:$0xff] 0.0
    $region21: #{tpu_custom_call.1} parent=1 // pred_fallthru
      _
    %v74 = vld [vmem:[#allocation2] sm:$0xff]
    %v75 = vld [vmem:[#allocation2 + $0x8] sm:$0xff]
    %v76 = vld [vmem:[#allocation5] sm:$0xff]
    %v77 = vld [vmem:[#allocation5 + $0x8] sm:$0xff]
    %v78 = vsub.f32 %v74, %v76
    %v79 = vsub.f32 %v75, %v77
    %v80 = vmul.f32 %v78, %v78
    %v81 = vmul.f32 %v79, %v79
    %v82 = vand.u32 2147483647, %v78
    %v83 = vand.u32 2147483647, %v79
    %v84 = vand.u32 2147483647, %v76
    %v85 = vand.u32 2147483647, %v77
    %vm86 = vcmp.gt.f32.partialorder %v84, 1.0
    %vm87 = vcmp.gt.f32.partialorder %v85, 1.0
    %v88 = vsel %vm86, %v80, 0.0
    %v89 = vsel %vm87, %v81, 0.0
    %v90 = vsel %vm86, 1, 0
    %v91 = vsel %vm87, 1, 0
    %v92 = vcvt.s32.f32 %v90
    %v93 = vcvt.s32.f32 %v91
    %v94 = vld [vmem:[#allocation8] sm:$0xff]
    %v95 = vadd.f32 %v80, %v81
    %v96 = vadd.f32 %v94, %v95
    %97 = vst [vmem:[#allocation8] sm:$0xff] %v96
    %v98 = vld [vmem:[#allocation7] sm:$0xff]
    %v99 = vadd.f32 %v88, %v89
    %v100 = vadd.f32 %v98, %v99
    %101 = vst [vmem:[#allocation7] sm:$0xff] %v100
    %v102 = vld [vmem:[#allocation10] sm:$0xff]
    %v103 = vadd.f32 %v92, %v93
    %v104 = vadd.f32 %v102, %v103
    %105 = vst [vmem:[#allocation10] sm:$0xff] %v104
    %v106 = vld [vmem:[#allocation11] sm:$0xff]
    %v107 = vmax.f32 %v82, %v83
    %v108 = vmax.f32 %v106, %v107
    %109 = vst [vmem:[#allocation11] sm:$0xff] %v108
    // Predicated region
    $region22: #{tpu_custom_call.1} parent=1 // pred_check
      _
    $region23: #{tpu_custom_call.1} parent=1 // pred_check_branch
      %111 = sbr.rel (0) target = $region25
    $region24: #{tpu_custom_call.1} parent=1 // pred_region
      %s113 = ssub.s32 128, 128
      %114 = vsyncadd [#allocation4], %s113
      %s116 = sshll.u32 [#allocation7], 4
      %s117 = int_to_ptr.vmem [resolvable:$true] %s116
      %119 = dma.vmem_to_hbm [thread:$0]  %s117, 128, %s2, [#allocation4]
    $region25: #{tpu_custom_call.1} parent=1 // pred_fallthru
      _
    // Predicated region
    $region26: #{tpu_custom_call.1} parent=1 // pred_check
      _
    $region27: #{tpu_custom_call.1} parent=1 // pred_check_branch
      %121 = sbr.rel (0) target = $region29
    $region28: #{tpu_custom_call.1} parent=1 // pred_region
      %s123 = ssub.s32 128, 128
      %124 = vsyncadd [#allocation9], %s123
      %s126 = sshll.u32 [#allocation8], 4
      %s127 = int_to_ptr.vmem [resolvable:$true] %s126
      %129 = dma.vmem_to_hbm [thread:$0]  %s127, 128, %s3, [#allocation9]
    $region29: #{tpu_custom_call.1} parent=1 // pred_fallthru
      _
    // Predicated region
    $region30: #{tpu_custom_call.1} parent=1 // pred_check
      _
    $region31: #{tpu_custom_call.1} parent=1 // pred_check_branch
      %131 = sbr.rel (0) target = $region33
    $region32: #{tpu_custom_call.1} parent=1 // pred_region
      %s133 = ssub.s32 128, 128
      %134 = vsyncadd [#allocation9], %s133
      %s136 = sshll.u32 [#allocation10], 4
      %s137 = int_to_ptr.vmem [resolvable:$true] %s136
      %139 = dma.vmem_to_hbm [thread:$0]  %s137, 128, %s4, [#allocation9]
    $region33: #{tpu_custom_call.1} parent=1 // pred_fallthru
      _
    // Predicated region
    $region34: #{tpu_custom_call.1} parent=1 // pred_check
      _
    $region35: #{tpu_custom_call.1} parent=1 // pred_check_branch
      %141 = sbr.rel (0) target = $region37
    $region36: #{tpu_custom_call.1} parent=1 // pred_region
      %s143 = ssub.s32 128, 128
      %144 = vsyncadd [#allocation12], %s143
      %s146 = sshll.u32 [#allocation11], 4
      %s147 = int_to_ptr.vmem [resolvable:$true] %s146
      %149 = dma.vmem_to_hbm [thread:$0]  %s147, 128, %s5, [#allocation12]
    $region37: #{tpu_custom_call.1} parent=1 // pred_fallthru
      _
    // Predicated region
    $region38: #{tpu_custom_call.1} parent=1 // pred_check
      _
    $region39: #{tpu_custom_call.1} parent=1 // pred_check_branch
      %151 = sbr.rel (0) target = $region41
    $region40: #{tpu_custom_call.1} parent=1 // pred_region
      %152 = dma.done [#allocation4], 128
    $region41: #{tpu_custom_call.1} parent=1 // pred_fallthru
      _
    // Predicated region
    $region42: #{tpu_custom_call.1} parent=1 // pred_check
      _
    $region43: #{tpu_custom_call.1} parent=1 // pred_check_branch
      %154 = sbr.rel (0) target = $region45
    $region44: #{tpu_custom_call.1} parent=1 // pred_region
      %155 = dma.done [#allocation9], 128
    $region45: #{tpu_custom_call.1} parent=1 // pred_fallthru
      _
    // Predicated region
    $region46: #{tpu_custom_call.1} parent=1 // pred_check
      _
    $region47: #{tpu_custom_call.1} parent=1 // pred_check_branch
      %157 = sbr.rel (0) target = $region49
    $region48: #{tpu_custom_call.1} parent=1 // pred_region
      %158 = dma.done [#allocation9], 128
    $region49: #{tpu_custom_call.1} parent=1 // pred_fallthru
      _
    // Predicated region
    $region50: #{tpu_custom_call.1} parent=1 // pred_check
      _
    $region51: #{tpu_custom_call.1} parent=1 // pred_check_branch
      %160 = sbr.rel (0) target = $region53
    $region52: #{tpu_custom_call.1} parent=1 // pred_region
      %161 = dma.done [#allocation12], 128
    $region53: #{tpu_custom_call.1} parent=1 // pred_fallthru
      _
    %162 = vsyncpa [#allocation3], 1
    %163 = vsyncpa [#allocation6], 1
    %164 = vsyncpa [#allocation4], 1
    %165 = vsyncpa [#allocation9], 1
    %166 = vsyncpa [#allocation12], 1

</llo_original>
